<compile_context>
chip_gen: v6e
topology: v6e:2x2x1
jax: 0.10.0
libtpu: 0.0.40
codegen_flags: <defaults>
</compile_context>

<pallas_src>
import math
import jax
import jax.numpy as jnp
from jax.experimental import pallas as pl
from jax.experimental.pallas import tpu as pltpu


def _erf(x):
    # Abramowitz & Stegun 7.1.26 rational approximation (max abs err ~1.5e-7).
    # exp and the reciprocal both run on the EUP slot -> nearly free next to
    # the VPU work.
    # TODO(synk): switch to a native erf lowering if/when Mosaic exposes one.
    a1, a2, a3, a4, a5 = (0.254829592, -0.284496736, 1.421413741,
                          -1.453152027, 1.061405429)
    p = 0.3275911
    s = jnp.where(x >= 0.0, 1.0, -1.0)
    ax = jnp.abs(x)
    t = pl.reciprocal(1.0 + p * ax, approx=True)
    poly = ((((a5 * t + a4) * t + a3) * t + a2) * t + a1) * t
    return s * (1.0 - poly * jnp.exp(-ax * ax))


def _gelu_exact(x):
    # Matches torch.nn.GELU() default (erf-based, NOT the tanh approximation).
    return 0.5 * x * (1.0 + _erf(x * (1.0 / math.sqrt(2.0))))


def _mlp_kernel(x_ref, w1_ref, b1_ref, w2_ref, b2_ref, o_ref, acc_ref):
    """Grid = (row_tiles [parallel], hidden_tiles [arbitrary, reduction])."""
    h_step = pl.program_id(1)

    @pl.when(h_step == 0)
    def _init():
        acc_ref[...] = jnp.zeros_like(acc_ref)

    # fc1 partial: (tm, K) @ (K, tH), bf16 operands, f32 accumulation.
    h = jnp.dot(x_ref[...], w1_ref[...], preferred_element_type=jnp.float32)
    h = h + b1_ref[...]                       # f32 bias slice
    h = _gelu_exact(h)                        # f32 on VPU/EUP (elementwise in H)
    # fc2 partial: cast hidden back to the MXU dtype, accumulate in f32 scratch.
    acc_ref[...] += jnp.dot(h.astype(w2_ref.dtype), w2_ref[...],
                            preferred_element_type=jnp.float32)

    @pl.when(h_step == pl.num_programs(1) - 1)
    def _finalize():
        o_ref[...] = (acc_ref[...] + b2_ref[...]).astype(o_ref.dtype)


def _round_up(x, m):
    return ((x + m - 1) // m) * m


def _pick_row_tile(M, block_m):
    if M <= 8:
        return M
    tm = min(block_m, M)
    # >= 2 row steps so the "parallel" axis can shard across v7x's 2 TCs
    # (per-step overhead ~0.35 us, negligible on v5e/v6e).
    tm = min(tm, _round_up((M + 1) // 2, 8))
    tm = max(8, (tm // 8) * 8)
    if M % tm != 0:
        d = tm
        while d > 8 and M % d != 0:
            d -= 8
        if M % d == 0:
            tm = d            # exact divisor -> no pad/unpad HBM round trips
    return tm


def mlp_forward(x, w1, b1, w2, b2, *, block_m=512, block_h=512,
                mxu_dtype=jnp.bfloat16):
    """Fused Mlp forward.  x: (..., in_features); weights stored (in, out)."""
    orig_shape = x.shape
    out_dtype = x.dtype
    K = orig_shape[-1]
    H = w1.shape[1]
    N = w2.shape[1]

    x2 = x.reshape(-1, K)
    M = x2.shape[0]

    # --- tile selection ------------------------------------------------------
    tm = _pick_row_tile(M, block_m)
    Mp = _round_up(M, tm)
    if Mp != M:               # fallback only when no clean divisor exists
        x2 = jnp.pad(x2, ((0, Mp - M), (0, 0)))

    tH = H
    if block_h < H and H % block_h == 0 and block_h % 128 == 0:
        tH = block_h
    num_m = Mp // tm
    num_h = H // tH

    # --- operand dtypes: bf16 into the MXU, f32 biases / accumulation --------
    x2 = x2.astype(mxu_dtype)
    w1c = w1.astype(mxu_dtype)
    w2c = w2.astype(mxu_dtype)
    b1c = jnp.asarray(b1, jnp.float32).reshape(1, H)
    b2c = jnp.asarray(b2, jnp.float32).reshape(1, N)

    # --- VMEM budget (double-buffered blocks + f32 accumulator, ~50% headroom)
    itm = jnp.dtype(mxu_dtype).itemsize
    ito = jnp.dtype(out_dtype).itemsize
    per_buf = (tm * K * itm + K * tH * itm + tH * 4
               + tH * N * itm + N * 4 + tm * N * ito)
    vmem_need = 2 * per_buf + tm * N * 4
    vmem_limit = int(min(max(int(vmem_need * 1.5) + (4 << 20), 32 << 20),
                         64 << 20))

    cost = pl.CostEstimate(
        flops=2 * M * (K * H + H * N),
        transcendentals=M * H,
        bytes_accessed=int(M * K * itm + M * N * ito
                           + num_m * (K * H * itm + H * N * itm + 4 * (H + N))),
    )

    out = pl.pallas_call(
        _mlp_kernel,
        out_shape=jax.ShapeDtypeStruct((Mp, N), out_dtype),
        grid=(num_m, num_h),
        in_specs=[
            pl.BlockSpec((tm, K), lambda i, h: (i, 0)),   # activations: row-tiled
            pl.BlockSpec((K, tH), lambda i, h: (0, h)),   # w1: H-sliced
            pl.BlockSpec((1, tH), lambda i, h: (0, h)),   # b1: H-sliced
            pl.BlockSpec((tH, N), lambda i, h: (h, 0)),   # w2: H-sliced
            pl.BlockSpec((1, N),  lambda i, h: (0, 0)),   # b2: resident
        ],
        out_specs=pl.BlockSpec((tm, N), lambda i, h: (i, 0)),
        scratch_shapes=[pltpu.VMEM((tm, N), jnp.float32)],  # f32 accumulator
        compiler_params=pltpu.CompilerParams(
            dimension_semantics=("parallel", "arbitrary"),
            vmem_limit_bytes=vmem_limit),
        cost_estimate=cost,
    )(x2, w1c, b1c, w2c, b2c)

    if Mp != M:
        out = out[:M]
    return out.reshape(*orig_shape[:-1], N)


def _mlp_reference(x, w1, b1, w2, b2):
    # Pure-JAX f32 reference matching torch: fc1 -> GELU(exact) -> fc2 (dropout=id).
    h = jax.nn.gelu(x @ w1 + b1, approximate=False)
    return h @ w2 + b2


if __name__ == "__main__":
    root = jax.random.PRNGKey(0)
    key_a, key_b = jax.random.split(root)

    def run_case(key, B, S, IN_F, HID_F, OUT_F, block_m, block_h):
        kx, k1, k2, k3, k4 = jax.random.split(key, 5)
        x = jax.random.normal(kx, (B, S, IN_F), jnp.float32)
        w1 = jax.random.normal(k1, (IN_F, HID_F), jnp.float32) * 0.02
        b1 = jax.random.normal(k2, (HID_F,), jnp.float32) * 0.02
        w2 = jax.random.normal(k3, (HID_F, OUT_F), jnp.float32) * 0.02
        b2 = jax.random.normal(k4, (OUT_F,), jnp.float32) * 0.02

        out = mlp_forward(x, w1, b1, w2, b2, block_m=block_m, block_h=block_h)
        jax.block_until_ready(out)

        assert out.shape == (B, S, OUT_F) and out.dtype == jnp.float32
        ref = _mlp_reference(x.reshape(-1, IN_F), w1, b1, w2, b2)
        ref = ref.reshape(B, S, OUT_F)
        # bf16 MXU operands + approx EUP reciprocal -> compare with a
        # bf16-appropriate tolerance against the f32 reference.
        assert jnp.allclose(out, ref, rtol=5e-2, atol=5e-3), \
            float(jnp.max(jnp.abs(out - ref)))

    # Small shapes consistent with the module (out_features defaults to in_features).
    run_case(key_a, B=2, S=8, IN_F=32, HID_F=64, OUT_F=32,
             block_m=512, block_h=512)
    # Lane/MXU-aligned config exercising the H-tiled reduction path
    # (2 row tiles x 2 hidden tiles) with bf16 MXU operands.
    run_case(key_b, B=2, S=64, IN_F=128, HID_F=256, OUT_F=128,
             block_m=64, block_h=128)

    print("KERNEL_OK")
</pallas_src>

<mosaic_0001>
module attributes {stable_mosaic.version = 11 : i64} {
  func.func @_mlp_kernel(%arg0: i32, %arg1: i32, %arg2: memref<8x32xbf16, #tpu.memory_space<vmem>>, %arg3: memref<32x64xbf16, #tpu.memory_space<vmem>>, %arg4: memref<1x64xf32, #tpu.memory_space<vmem>>, %arg5: memref<64x32xbf16, #tpu.memory_space<vmem>>, %arg6: memref<1x32xf32, #tpu.memory_space<vmem>>, %arg7: memref<8x32xf32, #tpu.memory_space<vmem>>, %arg8: memref<8x32xf32, #tpu.memory_space<vmem>>) attributes {dimension_semantics = [#tpu.dimension_semantics<parallel>, #tpu.dimension_semantics<arbitrary>], iteration_bounds = array<i64: 2, 1>, scalar_prefetch = 0 : i64, scratch_operands = 1 : i64, tpu.core_type = #tpu.core_type<tc>, window_params = [{transform_indices = @transform_0, window_bounds = array<i64: 8, 32>}, {transform_indices = @transform_1, window_bounds = array<i64: 32, 64>}, {transform_indices = @transform_2, window_bounds = array<i64: 1, 64>}, {transform_indices = @transform_3, window_bounds = array<i64: 64, 32>}, {pipeline_mode = #tpu.pipeline_mode<synchronous>, transform_indices = @transform_4, window_bounds = array<i64: 1, 32>}, {transform_indices = @transform_5, window_bounds = array<i64: 8, 32>}]} {
    %c0_i32 = arith.constant 0 : i32
    %0 = arith.cmpi eq, %arg1, %c0_i32 : i32
    %1 = arith.extui %0 : i1 to i32
    %c0_i32_0 = arith.constant 0 : i32
    %2 = arith.cmpi ne, %1, %c0_i32_0 : i32
    scf.if %2 {
      %cst_30 = arith.constant 0.000000e+00 : f32
      %58 = vector.broadcast %cst_30 : f32 to vector<8x32xf32>
      %c0_31 = arith.constant 0 : index
      %c0_32 = arith.constant 0 : index
      %59 = vector.load %arg8[%c0_31, %c0_32] : memref<8x32xf32, #tpu.memory_space<vmem>>, vector<8x32xf32>
      tpu.vector_store %arg8[%c0_31, %c0_32], %58 {strides = array<i32>} : memref<8x32xf32, #tpu.memory_space<vmem>>, vector<8x32xf32>,
    } else {
    }
    %c0 = arith.constant 0 : index
    %c0_1 = arith.constant 0 : index
    %3 = vector.load %arg2[%c0, %c0_1] : memref<8x32xbf16, #tpu.memory_space<vmem>>, vector<8x32xbf16>
    %c0_2 = arith.constant 0 : index
    %c0_3 = arith.constant 0 : index
    %4 = vector.load %arg3[%c0_2, %c0_3] : memref<32x64xbf16, #tpu.memory_space<vmem>>, vector<32x64xbf16>
    %cst = arith.constant dense<0.000000e+00> : vector<8x64xf32>
    %5 = tpu.matmul %3, %4, %cst {dimension_numbers = #tpu.dot_dimension_numbers<[1], [0], [0], [1], [0, 0, 1, 1], [], []>} : vector<8x32xbf16>, vector<32x64xbf16>, vector<8x64xf32> -> vector<8x64xf32>
    %c0_4 = arith.constant 0 : index
    %c0_5 = arith.constant 0 : index
    %6 = vector.load %arg4[%c0_4, %c0_5] : memref<1x64xf32, #tpu.memory_space<vmem>>, vector<1x64xf32>
    %7 = vector.broadcast %6 : vector<1x64xf32> to vector<8x64xf32>
    %8 = arith.addf %5, %7 : vector<8x64xf32>
    %cst_6 = arith.constant 5.000000e-01 : f32
    %9 = vector.broadcast %cst_6 : f32 to vector<8x64xf32>
    %10 = arith.mulf %9, %8 : vector<8x64xf32>
    %cst_7 = arith.constant 0.707106769 : f32
    %11 = vector.broadcast %cst_7 : f32 to vector<8x64xf32>
    %12 = arith.mulf %8, %11 : vector<8x64xf32>
    %cst_8 = arith.constant 0.000000e+00 : f32
    %13 = vector.broadcast %cst_8 : f32 to vector<8x64xf32>
    %14 = arith.cmpf oge, %12, %13 : vector<8x64xf32>
    %cst_9 = arith.constant 1.000000e+00 : f32
    %cst_10 = arith.constant -1.000000e+00 : f32
    %15 = vector.broadcast %cst_9 : f32 to vector<8x64xf32>
    %16 = vector.broadcast %cst_10 : f32 to vector<8x64xf32>
    %17 = arith.select %14, %15, %16 : vector<8x64xi1>, vector<8x64xf32>
    %18 = math.absf %12 : vector<8x64xf32>
    %cst_11 = arith.constant 0.327591091 : f32
    %19 = vector.broadcast %cst_11 : f32 to vector<8x64xf32>
    %20 = arith.mulf %19, %18 : vector<8x64xf32>
    %cst_12 = arith.constant 1.000000e+00 : f32
    %21 = vector.broadcast %cst_12 : f32 to vector<8x64xf32>
    %22 = arith.addf %21, %20 : vector<8x64xf32>
    %23 = tpu.reciprocal %22 {approx = true} : vector<8x64xf32> -> vector<8x64xf32>
    %cst_13 = arith.constant 1.06140542 : f32
    %24 = vector.broadcast %cst_13 : f32 to vector<8x64xf32>
    %25 = arith.mulf %24, %23 : vector<8x64xf32>
    %cst_14 = arith.constant -1.45315206 : f32
    %26 = vector.broadcast %cst_14 : f32 to vector<8x64xf32>
    %27 = arith.addf %25, %26 : vector<8x64xf32>
    %28 = arith.mulf %27, %23 : vector<8x64xf32>
    %cst_15 = arith.constant 1.42141378 : f32
    %29 = vector.broadcast %cst_15 : f32 to vector<8x64xf32>
    %30 = arith.addf %28, %29 : vector<8x64xf32>
    %31 = arith.mulf %30, %23 : vector<8x64xf32>
    %cst_16 = arith.constant -0.284496725 : f32
    %32 = vector.broadcast %cst_16 : f32 to vector<8x64xf32>
    %33 = arith.addf %31, %32 : vector<8x64xf32>
    %34 = arith.mulf %33, %23 : vector<8x64xf32>
    %cst_17 = arith.constant 0.254829586 : f32
    %35 = vector.broadcast %cst_17 : f32 to vector<8x64xf32>
    %36 = arith.addf %34, %35 : vector<8x64xf32>
    %37 = arith.mulf %36, %23 : vector<8x64xf32>
    %cst_18 = arith.constant 0.000000e+00 : f32
    %38 = vector.broadcast %cst_18 : f32 to vector<8x64xf32>
    %39 = arith.subf %38, %18 : vector<8x64xf32>
    %40 = arith.mulf %39, %18 : vector<8x64xf32>
    %41 = math.exp %40 : vector<8x64xf32>
    %42 = arith.mulf %37, %41 : vector<8x64xf32>
    %cst_19 = arith.constant 1.000000e+00 : f32
    %43 = vector.broadcast %cst_19 : f32 to vector<8x64xf32>
    %44 = arith.subf %43, %42 : vector<8x64xf32>
    %45 = arith.mulf %17, %44 : vector<8x64xf32>
    %cst_20 = arith.constant 1.000000e+00 : f32
    %46 = vector.broadcast %cst_20 : f32 to vector<8x64xf32>
    %47 = arith.addf %46, %45 : vector<8x64xf32>
    %48 = arith.mulf %10, %47 : vector<8x64xf32>
    %c0_21 = arith.constant 0 : index
    %c0_22 = arith.constant 0 : index
    %49 = vector.load %arg8[%c0_21, %c0_22] : memref<8x32xf32, #tpu.memory_space<vmem>>, vector<8x32xf32>
    %50 = arith.truncf %48 : vector<8x64xf32> to vector<8x64xbf16>
    %c0_23 = arith.constant 0 : index
    %c0_24 = arith.constant 0 : index
    %51 = vector.load %arg5[%c0_23, %c0_24] : memref<64x32xbf16, #tpu.memory_space<vmem>>, vector<64x32xbf16>
    %cst_25 = arith.constant dense<0.000000e+00> : vector<8x32xf32>
    %52 = tpu.matmul %50, %51, %cst_25 {dimension_numbers = #tpu.dot_dimension_numbers<[1], [0], [0], [1], [0, 0, 1, 1], [], []>} : vector<8x64xbf16>, vector<64x32xbf16>, vector<8x32xf32> -> vector<8x32xf32>
    %53 = arith.addf %49, %52 : vector<8x32xf32>
    %c0_26 = arith.constant 0 : index
    %c0_27 = arith.constant 0 : index
    %54 = vector.load %arg8[%c0_26, %c0_27] : memref<8x32xf32, #tpu.memory_space<vmem>>, vector<8x32xf32>
    tpu.vector_store %arg8[%c0_26, %c0_27], %53 {strides = array<i32>} : memref<8x32xf32, #tpu.memory_space<vmem>>, vector<8x32xf32>,
    %c0_i32_28 = arith.constant 0 : i32
    %55 = arith.cmpi eq, %arg1, %c0_i32_28 : i32
    %56 = arith.extui %55 : i1 to i32
    %c0_i32_29 = arith.constant 0 : i32
    %57 = arith.cmpi ne, %56, %c0_i32_29 : i32
    scf.if %57 {
      %c0_30 = arith.constant 0 : index
      %c0_31 = arith.constant 0 : index
      %58 = vector.load %arg8[%c0_30, %c0_31] : memref<8x32xf32, #tpu.memory_space<vmem>>, vector<8x32xf32>
      %c0_32 = arith.constant 0 : index
      %c0_33 = arith.constant 0 : index
      %59 = vector.load %arg6[%c0_32, %c0_33] : memref<1x32xf32, #tpu.memory_space<vmem>>, vector<1x32xf32>
      %60 = vector.broadcast %59 : vector<1x32xf32> to vector<8x32xf32>
      %61 = arith.addf %58, %60 : vector<8x32xf32>
      %c0_34 = arith.constant 0 : index
      %c0_35 = arith.constant 0 : index
      %62 = vector.load %arg7[%c0_34, %c0_35] : memref<8x32xf32, #tpu.memory_space<vmem>>, vector<8x32xf32>
      tpu.vector_store %arg7[%c0_34, %c0_35], %61 {strides = array<i32>} : memref<8x32xf32, #tpu.memory_space<vmem>>, vector<8x32xf32>,
    } else {
    }
    return
  }
  func.func @transform_0(%arg0: i32, %arg1: i32) -> (i32, i32) {
    %c0_i32 = arith.constant 0 : i32
    %c0_i32_0 = arith.constant 0 : i32
    return %arg0, %c0_i32 : i32, i32
  }
  func.func @transform_1(%arg0: i32, %arg1: i32) -> (i32, i32) {
    %c0_i32 = arith.constant 0 : i32
    %c0_i32_0 = arith.constant 0 : i32
    return %c0_i32, %arg1 : i32, i32
  }
  func.func @transform_2(%arg0: i32, %arg1: i32) -> (i32, i32) {
    %c0_i32 = arith.constant 0 : i32
    %c0_i32_0 = arith.constant 0 : i32
    return %c0_i32, %arg1 : i32, i32
  }
  func.func @transform_3(%arg0: i32, %arg1: i32) -> (i32, i32) {
    %c0_i32 = arith.constant 0 : i32
    %c0_i32_0 = arith.constant 0 : i32
    return %arg1, %c0_i32 : i32, i32
  }
  func.func @transform_4(%arg0: i32, %arg1: i32) -> (i32, i32) {
    %c0_i32 = arith.constant 0 : i32
    %c0_i32_0 = arith.constant 0 : i32
    %c0_i32_1 = arith.constant 0 : i32
    return %c0_i32, %c0_i32_0 : i32, i32
  }
  func.func @transform_5(%arg0: i32, %arg1: i32) -> (i32, i32) {
    %c0_i32 = arith.constant 0 : i32
    %c0_i32_0 = arith.constant 0 : i32
    return %arg0, %c0_i32 : i32, i32
  }
}

</mosaic_0001>

<llo_original>
// kernel: tpu_custom_call.1
$region0: #{tpu_custom_call.1}
  #allocation0 [shape = 'u32[]', space=smem, size = 0x4, offset = 0x4, fixed_abs, tag = 'smem constant byte address 0x4 - core index']
  #allocation1 [shape = 'u32[144,128]{1,0:T(1,128)}', space=vmem, size = 0x12000, scoped, tag = 'internal scratch']
  #allocation2 [shape = 'f32[8,32]{1,0:T(8,128)}', space=vmem, size = 0x1000, scoped, tag = 'scratch operand']
  %s0 = inlined_call_operand.vmem [shape: bf16[16,32], index: 0, kind: input, shape index: {}]
  %s1 = inlined_call_operand.vmem [shape: bf16[32,64], index: 1, kind: input, shape index: {}]
  %s2 = inlined_call_operand.vmem [shape: f32[1,64], index: 2, kind: input, shape index: {}]
  %s3 = inlined_call_operand.vmem [shape: bf16[64,32], index: 3, kind: input, shape index: {}]
  %s4 = inlined_call_operand.vmem [shape: f32[1,32], index: 4, kind: input, shape index: {}]
  %s5 = inlined_call_operand.hbm [shape: f32[16,32], index: 5, kind: output, shape index: {}]
  %s6 = sld [smem:[#allocation0]]
  $region61: #{tpu_custom_call.1} parent=0
    _
  %s8 = ssub.s32 1, %s6
  %s9 = scalar_select 0, %s8, %s6
  $region1: #{tpu_custom_call.1} parent=0
    #allocation3 [shape = 'u8[8192]{0}', space=vmem, size = 0x2000, scoped, tag = 'output window, operand 0']
    #allocation4 [shape = 's32[2]{0}', space=sflag, size = 0x8, scoped, tag = 'scoped memory for tpu_custom_call.1']
    %10 = vsyncpa [#allocation4], 0
    %s11 = scalar_lea.sflag [#allocation4], 1
    %12 = vsyncpa %s11, 0
    loop: start=0, step=1, limit=4
    $region2: #{tpu_custom_call.1} parent=1 // loop_pre_header
      _
    $region3: #{tpu_custom_call.1} parent=1 // loop_header
      %s14 = sphi 0, %s18
      %p15 = scmp.ge.s32.totalorder %s14, 4
      %s21 = sphi 0, %s33
      %s22 = sphi 0, %s29
      %s23 = sphi 0, %s21
      %s24 = sphi 0, %s22
      %s25 = sphi 0, %s23
      %s26 = sphi 0, %s24
      %s36 = sphi 0, %s38
      %s39 = sphi 0, %s36
      %s40 = sphi 0, %s39
      %s56 = sphi 0, %s40
      %s62 = sphi 0, %s64
      %s65 = sphi 0, %s62
      %s66 = sphi 0, %s65
      %s82 = sphi 0, %s66
      %s88 = sphi 0, %s90
      %s91 = sphi 0, %s88
      %s92 = sphi 0, %s91
      %s108 = sphi 0, %s92
      %s114 = sphi 0, %s116
      %s117 = sphi 0, %s114
      %s118 = sphi 0, %s117
      %s134 = sphi 0, %s118
      %s138 = sphi 0, %s138
      %s140 = sphi 0, %s138
      %s141 = sphi 0, %s140
      %s155 = sphi 0, %s141
      %s161 = sphi 0, %s163
      %s164 = sphi 0, %s161
      %s165 = sphi 0, %s164
      %s181 = sphi 0, %s165
    $region4: #{tpu_custom_call.1} parent=1 // loop_header_branch
      %17 = sbr.rel (%p15) target = $region8
    $region5: #{tpu_custom_call.1} parent=1 // loop_body
      %s19 = ssub.s32 %s14, 1
      %s20 = ssub.s32 %s14, 2
      %s27 = sadd.s32 1, %s22
      %p28 = scmp.ge.s32.totalorder %s27, 1
      %s29 = scalar_select %p28, 0, %s27
      %s30 = sadd.s32 1, %s21
      %s31 = scalar_select %p28, %s30, %s21
      %p32 = scmp.ge.s32.totalorder %s31, 2
      %s33 = scalar_select %p32, 0, %s31
      %s34 = ssub.s32 %s21, %s33
      %p35 = scmp.eq.s32.totalorder %s34, 0
      %s37 = sadd.s32 %s36, 1
      %s38 = scalar_select %p35, %s36, %s37
      %p41 = pneg %p35
      %p42 = scmp.eq.s32.totalorder %s14, 1
      %p43 = por %p41, %p42
      %p44 = scmp.ne.s32.totalorder %s36, %s39
      %p45 = scmp.eq.s32.totalorder %s14, 0
      %p46 = por %p44, %p45
      %p47 = scmp.ne.s32.totalorder %s36, %s39
      %p48 = scmp.eq.s32.totalorder %s19, 1
      %p49 = por %p47, %p48
      %p50 = scmp.ne.s32.totalorder %s39, %s40
      %p51 = scmp.eq.s32.totalorder %s19, 0
      %p52 = por %p50, %p51
      %p53 = scmp.ne.s32.totalorder %s39, %s40
      %p54 = scmp.eq.s32.totalorder %s20, 1
      %p55 = por %p53, %p54
      %p57 = scmp.ne.s32.totalorder %s40, %s56
      %p58 = scmp.eq.s32.totalorder %s20, 0
      %p59 = por %p57, %p58
      %s60 = ssub.s32 %s22, %s29
      %p61 = scmp.eq.s32.totalorder %s60, 0
      %s63 = sadd.s32 %s62, 1
      %s64 = scalar_select %p61, %s62, %s63
      %p67 = pneg %p61
      %p68 = scmp.eq.s32.totalorder %s14, 1
      %p69 = por %p67, %p68
      %p70 = scmp.ne.s32.totalorder %s62, %s65
      %p71 = scmp.eq.s32.totalorder %s14, 0
      %p72 = por %p70, %p71
      %p73 = scmp.ne.s32.totalorder %s62, %s65
      %p74 = scmp.eq.s32.totalorder %s19, 1
      %p75 = por %p73, %p74
      %p76 = scmp.ne.s32.totalorder %s65, %s66
      %p77 = scmp.eq.s32.totalorder %s19, 0
      %p78 = por %p76, %p77
      %p79 = scmp.ne.s32.totalorder %s65, %s66
      %p80 = scmp.eq.s32.totalorder %s20, 1
      %p81 = por %p79, %p80
      %p83 = scmp.ne.s32.totalorder %s66, %s82
      %p84 = scmp.eq.s32.totalorder %s20, 0
      %p85 = por %p83, %p84
      %s86 = ssub.s32 %s22, %s29
      %p87 = scmp.eq.s32.totalorder %s86, 0
      %s89 = sadd.s32 %s88, 1
      %s90 = scalar_select %p87, %s88, %s89
      %p93 = pneg %p87
      %p94 = scmp.eq.s32.totalorder %s14, 1
      %p95 = por %p93, %p94
      %p96 = scmp.ne.s32.totalorder %s88, %s91
      %p97 = scmp.eq.s32.totalorder %s14, 0
      %p98 = por %p96, %p97
      %p99 = scmp.ne.s32.totalorder %s88, %s91
      %p100 = scmp.eq.s32.totalorder %s19, 1
      %p101 = por %p99, %p100
      %p102 = scmp.ne.s32.totalorder %s91, %s92
      %p103 = scmp.eq.s32.totalorder %s19, 0
      %p104 = por %p102, %p103
      %p105 = scmp.ne.s32.totalorder %s91, %s92
      %p106 = scmp.eq.s32.totalorder %s20, 1
      %p107 = por %p105, %p106
      %p109 = scmp.ne.s32.totalorder %s92, %s108
      %p110 = scmp.eq.s32.totalorder %s20, 0
      %p111 = por %p109, %p110
      %s112 = ssub.s32 %s22, %s29
      %p113 = scmp.eq.s32.totalorder %s112, 0
      %s115 = sadd.s32 %s114, 1
      %s116 = scalar_select %p113, %s114, %s115
      %p119 = pneg %p113
      %p120 = scmp.eq.s32.totalorder %s14, 1
      %p121 = por %p119, %p120
      %p122 = scmp.ne.s32.totalorder %s114, %s117
      %p123 = scmp.eq.s32.totalorder %s14, 0
      %p124 = por %p122, %p123
      %p125 = scmp.ne.s32.totalorder %s114, %s117
      %p126 = scmp.eq.s32.totalorder %s19, 1
      %p127 = por %p125, %p126
      %p128 = scmp.ne.s32.totalorder %s117, %s118
      %p129 = scmp.eq.s32.totalorder %s19, 0
      %p130 = por %p128, %p129
      %p131 = scmp.ne.s32.totalorder %s117, %s118
      %p132 = scmp.eq.s32.totalorder %s20, 1
      %p133 = por %p131, %p132
      %p135 = scmp.ne.s32.totalorder %s118, %s134
      %p136 = scmp.eq.s32.totalorder %s20, 0
      %p137 = por %p135, %p136
      %s139 = sadd.s32 %s138, 1
      %p142 = scmp.eq.s32.totalorder %s14, 1
      %p143 = scmp.ne.s32.totalorder %s138, %s140
      %p144 = scmp.eq.s32.totalorder %s14, 0
      %p145 = por %p143, %p144
      %p146 = scmp.ne.s32.totalorder %s138, %s140
      %p147 = scmp.eq.s32.totalorder %s19, 1
      %p148 = por %p146, %p147
      %p149 = scmp.ne.s32.totalorder %s140, %s141
      %p150 = scmp.eq.s32.totalorder %s19, 0
      %p151 = por %p149, %p150
      %p152 = scmp.ne.s32.totalorder %s140, %s141
      %p153 = scmp.eq.s32.totalorder %s20, 1
      %p154 = por %p152, %p153
      %p156 = scmp.ne.s32.totalorder %s141, %s155
      %p157 = scmp.eq.s32.totalorder %s20, 0
      %p158 = por %p156, %p157
      %s159 = ssub.s32 %s21, %s33
      %p160 = scmp.eq.s32.totalorder %s159, 0
      %s162 = sadd.s32 %s161, 1
      %s163 = scalar_select %p160, %s161, %s162
      %p166 = pneg %p160
      %p167 = scmp.eq.s32.totalorder %s14, 1
      %p168 = por %p166, %p167
      %p169 = scmp.ne.s32.totalorder %s161, %s164
      %p170 = scmp.eq.s32.totalorder %s14, 0
      %p171 = por %p169, %p170
      %p172 = scmp.ne.s32.totalorder %s161, %s164
      %p173 = scmp.eq.s32.totalorder %s19, 1
      %p174 = por %p172, %p173
      %p175 = scmp.ne.s32.totalorder %s164, %s165
      %p176 = scmp.eq.s32.totalorder %s19, 0
      %p177 = por %p175, %p176
      %p178 = scmp.ne.s32.totalorder %s164, %s165
      %p179 = scmp.eq.s32.totalorder %s20, 1
      %p180 = por %p178, %p179
      %p182 = scmp.ne.s32.totalorder %s165, %s181
      %p183 = scmp.eq.s32.totalorder %s20, 0
      %p184 = por %p182, %p183
      %p185 = scmp.le.s32.totalorder 1, %s14
      %p186 = scmp.lt.s32.totalorder %s14, 3
      %p187 = pnand %p185, %p186
      %p188 = pneg %p187
      // Predicated region
      $region9: #{tpu_custom_call.1} parent=5 // pred_check
        _
      $region10: #{tpu_custom_call.1} parent=5 // pred_check_branch
        %190 = sbr.rel (%p187) target = $region12
      $region11: #{tpu_custom_call.1} parent=5 // pred_region
        %s191 = ssub.s32 %s14, 1
        // Predicated region
        $region13: #{tpu_custom_call.1} parent=11 // pred_check
          %p192 = pneg %p78
        $region14: #{tpu_custom_call.1} parent=11 // pred_check_branch
          %194 = sbr.rel (%p192) target = $region16
        $region15: #{tpu_custom_call.1} parent=11 // pred_region
          %p195 = scmp.lt.s32.totalorder %s24, 0
          %s196 = scalar_select %p195, %s24, 0
          %s197 = smul.addr %s196, 4
          %s198 = scalar_lea.vmem %s1, %s197
        $region16: #{tpu_custom_call.1} parent=11 // pred_fallthru
          _
        // Predicated region
        $region17: #{tpu_custom_call.1} parent=11 // pred_check
          %p199 = pneg %p104
        $region18: #{tpu_custom_call.1} parent=11 // pred_check_branch
          %201 = sbr.rel (%p199) target = $region20
        $region19: #{tpu_custom_call.1} parent=11 // pred_region
          %p202 = scmp.lt.s32.totalorder %s24, 0
          %s203 = scalar_select %p202, %s24, 0
          %s204 = scalar_lea.vmem %s2, %s203
        $region20: #{tpu_custom_call.1} parent=11 // pred_fallthru
          _
        // Predicated region
        $region21: #{tpu_custom_call.1} parent=11 // pred_check
          %p205 = pneg %p130
        $region22: #{tpu_custom_call.1} parent=11 // pred_check_branch
          %207 = sbr.rel (%p205) target = $region24
        $region23: #{tpu_custom_call.1} parent=11 // pred_region
          %s208 = smul.u32 8, %s24
          %p209 = scmp.lt.s32.totalorder %s208, 7
          %s210 = scalar_select %p209, %s208, 7
          %s211 = smul.addr %s210, 4
          %s212 = scalar_lea.vmem %s3, %s211
          %s213 = smul.u32 8, %s24
        $region24: #{tpu_custom_call.1} parent=11 // pred_fallthru
          _
        // Predicated region
        $region25: #{tpu_custom_call.1} parent=11 // pred_check
          %p214 = pneg %p151
        $region26: #{tpu_custom_call.1} parent=11 // pred_check_branch
          %216 = sbr.rel (%p214) target = $region28
        $region27: #{tpu_custom_call.1} parent=11 // pred_region
          _
        $region28: #{tpu_custom_call.1} parent=11 // pred_fallthru
          _
      $region12: #{tpu_custom_call.1} parent=5 // pred_fallthru
        _
      %p217 = scmp.lt.s32.totalorder %s14, 2
      // Predicated region
      $region29: #{tpu_custom_call.1} parent=5 // pred_check
        %p218 = pneg %p217
      $region30: #{tpu_custom_call.1} parent=5 // pred_check_branch
        %220 = sbr.rel (%p218) target = $region32
      $region31: #{tpu_custom_call.1} parent=5 // pred_region
        // Predicated region
        $region33: #{tpu_custom_call.1} parent=31 // pred_check
          %p221 = pneg %p46
        $region34: #{tpu_custom_call.1} parent=31 // pred_check_branch
          %223 = sbr.rel (%p221) target = $region36
        $region35: #{tpu_custom_call.1} parent=31 // pred_region
          %p224 = scmp.lt.s32.totalorder %s21, 1
          %s225 = scalar_select %p224, %s21, 1
          %s226 = smul.addr %s225, 4
          %s227 = scalar_lea.vmem %s0, %s226
        $region36: #{tpu_custom_call.1} parent=31 // pred_fallthru
          _
      $region32: #{tpu_custom_call.1} parent=5 // pred_fallthru
        _
      %p228 = scmp.le.s32.totalorder 1, %s14
      %p229 = scmp.lt.s32.totalorder %s14, 3
      %p230 = pnand %p228, %p229
      %p231 = pneg %p230
      // Predicated region
      $region37: #{tpu_custom_call.1} parent=5 // pred_check
        _
      $region38: #{tpu_custom_call.1} parent=5 // pred_check_branch
        %233 = sbr.rel (%p230) target = $region40
      $region39: #{tpu_custom_call.1} parent=5 // pred_region
        %s234 = ssub.s32 %s14, 1
        %p235 = scmp.lt.s32.totalorder %s23, 1
        %s236 = scalar_select %p235, %s23, 1
        %s237 = smul.addr %s236, 4
        %s238 = scalar_lea.vmem %s0, %s237
        %p239 = pneg %p52
        %p240 = pneg %p49
        %p241 = scmp.lt.s32.totalorder %s24, 0
        %s242 = scalar_select %p241, %s24, 0
        %s243 = smul.addr %s242, 4
        %s244 = scalar_lea.vmem %s1, %s243
        %p245 = pneg %p78
        %p246 = pneg %p75
        %p247 = scmp.lt.s32.totalorder %s24, 0
        %s248 = scalar_select %p247, %s24, 0
        %s249 = scalar_lea.vmem %s2, %s248
        %p250 = pneg %p104
        %p251 = pneg %p101
        %s252 = smul.u32 8, %s24
        %p253 = scmp.lt.s32.totalorder %s252, 7
        %s254 = scalar_select %p253, %s252, 7
        %s255 = smul.addr %s254, 4
        %s256 = scalar_lea.vmem %s3, %s255
        %p257 = pneg %p130
        %p258 = pneg %p127
        %p259 = pneg %p151
        %p260 = pneg %p148
        %p261 = pneg %p177
        %p262 = pneg %p174
        %s263 = sand.u32 %s164, 1
        %s264 = scalar_lea.sflag [#allocation4], %s263
        %s265 = sand.u32 %s164, 1
        %s266 = smul.addr %s265, 8
        %s267 = scalar_lea.vmem [#allocation3], %s266
        %p268 = scmp.lt.s32.totalorder %s23, 1
        %s269 = scalar_select %p268, %s23, 1
        %s270 = smul.addr %s269, 4
        %s271 = scalar_lea.vmem %s0, %s270
        %p272 = scmp.lt.s32.totalorder %s24, 0
        %s273 = scalar_select %p272, %s24, 0
        %s274 = smul.addr %s273, 4
        %s275 = scalar_lea.vmem %s1, %s274
        %p276 = scmp.lt.s32.totalorder %s24, 0
        %s277 = scalar_select %p276, %s24, 0
        %s278 = scalar_lea.vmem %s2, %s277
        %s279 = smul.u32 8, %s24
        %p280 = scmp.lt.s32.totalorder %s279, 7
        %s281 = scalar_select %p280, %s279, 7
        %s282 = smul.addr %s281, 4
        %s283 = scalar_lea.vmem %s3, %s282
        %s284 = smul.u32 8, %s24
        %p286 = scmp.eq.s32.totalorder %s24, 0
        // Predicated region
        $region41: #{tpu_custom_call.1} parent=39 // pred_check
          %p287 = pneg %p286
        $region42: #{tpu_custom_call.1} parent=39 // pred_check_branch
          %289 = sbr.rel (%p287) target = $region44
        $region43: #{tpu_custom_call.1} parent=39 // pred_region
          %vm290 = vcmask 261120
          %291 = vst.msk [vmem:[#allocation2] sm:$0xff] %vm290, 0.0
        $region44: #{tpu_custom_call.1} parent=39 // pred_fallthru
          _
        %v292 = vld [vmem:[%s271] sm:$0xf]
        %v293 = vld [vmem:[%s275] sm:$0xf]
        %v294 = vld [vmem:[%s275 + $0x4] sm:$0xf]
        %v295 = vld [vmem:[%s275 + $0x8] sm:$0xf]
        %v296 = vld [vmem:[%s275 + $0xc] sm:$0xf]
        %v297 = vld [vmem:[%s278] sm:$0x1]
        %v299 = vlaneseq
        %v300 = vshrl.u32 %v299, 7
        %v301 = vsub.s32 0, %v300
        %v302 = vrot.slane %v297, %v301
        %v308 = vunpack.c.l.b16 %v293
        %v309 = vunpack.c.l.b16 %v294
        %v310 = vunpack.c.l.b16 %v295
        %v311 = vunpack.c.l.b16 %v296
        %v312 = vpack.c.b16 %v309, %v308
        %v313 = vpack.c.b16 %v311, %v310
        %vm316 = vcmask 261120
        %v318 = vsel %vm316, %v292, 0
        %320 = vmatprep.subr.bf16.mxu0 0
        %321 = vmatpush1.bf16.msra.mxu0 0
        %322 = vmatprep.subr.bf16.mxu0 0
        %323 = vmatpush1.bf16.msra.mxu0 0
        %324 = vmatprep.subr.bf16.mxu0 0
        %325 = vmatpush1.bf16.msra.mxu0 0
        %326 = vmatprep.subr.bf16.mxu0 0
        %327 = vmatpush1.bf16.msra.mxu0 0
        %328 = vmatprep.subr.bf16.mxu0 0
        %329 = vmatpush1.bf16.msra.mxu0 0
        %330 = vmatprep.subr.bf16.mxu0 0
        %331 = vmatpush1.bf16.msra.mxu0 0
        %332 = vmatprep.subr.bf16.mxu0 0
        %333 = vmatpush1.bf16.msra.mxu0 %v313
        %334 = vmatprep.subr.bf16.mxu0 0
        %335 = vmatpush1.bf16.msra.mxu0 %v312
        %336 = vmatprep.subr.bf16.mxu0 0
        %337 = vmatpush2.bf16.msra.mxu0 0
        %338 = vmatprep.subr.bf16.mxu0 0
        %339 = vmatpush2.bf16.msra.mxu0 0
        %340 = vmatprep.subr.bf16.mxu0 0
        %341 = vmatpush2.bf16.msra.mxu0 0
        %342 = vmatprep.subr.bf16.mxu0 0
        %343 = vmatpush2.bf16.msra.mxu0 0
        %344 = vmatprep.subr.bf16.mxu0 0
        %345 = vmatpush2.bf16.msra.mxu0 0
        %346 = vmatprep.subr.bf16.mxu0 0
        %347 = vmatpush2.bf16.msra.mxu0 0
        %348 = vmatprep.subr.bf16.mxu0 0
        %349 = vmatpush2.bf16.msra.mxu0 0
        %350 = vmatprep.subr.bf16.mxu0 0
        %351 = vmatpush2.bf16.msra.mxu0 0
        %352 = vmatprep.mubr.bf16.mxu0 0
        %353 = vmatmul.mubr.bf16.gmra.mxu0 %v318
        %v354 = vpop.f32.mrf.mxu0
        %v355 = vadd.f32 %v302, %v354
        %v356 = vpop.f32.mrf.mxu0
        %v357 = vpop.f32.mrf.mxu0
        %v358 = vpop.f32.mrf.mxu0
        %359 = vdwg.mxu0
        %v360 = vmul.f32 %v355, 0.5
        %v361 = vmul.f32 %v355, 0.70710677
        %vm362 = vcmp.ge.f32.partialorder %v361, 0.0
        %v363 = vsel %vm362, 1.0, -1.0
        %v364 = vand.u32 2147483647, %v361
        %v365 = vmul.f32 %v364, 0.3275911
        %v366 = vadd.f32 %v365, 1.0
        %v367 = vrcp.pop %v366
        %v368 = vmul.f32 %v367, 1.0614054
        %v369 = vadd.f32 %v368, -1.4531521
        %v370 = vmul.f32 %v369, %v367
        %v371 = vadd.f32 %v370, 1.4214138
        %v372 = vmul.f32 %v371, %v367
        %v373 = vadd.f32 %v372, -0.28449672
        %v374 = vmul.f32 %v373, %v367
        %v375 = vadd.f32 %v374, 0.2548296
        %v376 = vmul.f32 %v375, %v367
        %v377 = vsub.f32 0.0, %v364
        %v378 = vmul.f32 %v377, %v364
        %v379 = vmul.f32 %v378, 1.442695
        %v380 = vpow.pop %v379
        %v381 = vmul.f32 %v376, %v380
        %v382 = vsub.f32 1.0, %v381
        %v383 = vmul.f32 %v363, %v382
        %v384 = vadd.f32 %v383, 1.0
        %v385 = vmul.f32 %v360, %v384
        %v386 = vld [vmem:[#allocation2] sm:$0xff]
        %v387 = vpack.c.bf16 %v385, %v385
        %v388 = vld [vmem:[%s283] sm:$0xf]
        %v389 = vld [vmem:[%s283 + $0x4] sm:$0xf]
        %v390 = vld [vmem:[%s283 + $0x8] sm:$0xf]
        %v391 = vld [vmem:[%s283 + $0xc] sm:$0xf]
        %v392 = vld [vmem:[%s283 + $0x10] sm:$0xf]
        %v393 = vld [vmem:[%s283 + $0x14] sm:$0xf]
        %v394 = vld [vmem:[%s283 + $0x18] sm:$0xf]
        %v395 = vld [vmem:[%s283 + $0x1c] sm:$0xf]
        %v404 = vunpack.c.l.b16 %v388
        %v405 = vunpack.c.l.b16 %v389
        %v406 = vunpack.c.l.b16 %v390
        %v407 = vunpack.c.l.b16 %v391
        %v408 = vunpack.c.l.b16 %v392
        %v409 = vunpack.c.l.b16 %v393
        %v410 = vunpack.c.l.b16 %v394
        %v411 = vunpack.c.l.b16 %v395
        %v412 = vpack.c.b16 %v405, %v404
        %v413 = vpack.c.b16 %v407, %v406
        %v414 = vpack.c.b16 %v409, %v408
        %v415 = vpack.c.b16 %v411, %v410
        %vm420 = vcmask 523264
        %v422 = vsel %vm420, %v387, 0
        %424 = vmatprep.subr.bf16.mxu0 0
        %425 = vmatpush1.bf16.msra.mxu0 0
        %426 = vmatprep.subr.bf16.mxu0 0
        %427 = vmatpush1.bf16.msra.mxu0 0
        %428 = vmatprep.subr.bf16.mxu0 0
        %429 = vmatpush1.bf16.msra.mxu0 0
        %430 = vmatprep.subr.bf16.mxu0 0
        %431 = vmatpush1.bf16.msra.mxu0 0
        %432 = vmatprep.subr.bf16.mxu0 0
        %433 = vmatpush1.bf16.msra.mxu0 %v415
        %434 = vmatprep.subr.bf16.mxu0 0
        %435 = vmatpush1.bf16.msra.mxu0 %v414
        %436 = vmatprep.subr.bf16.mxu0 0
        %437 = vmatpush1.bf16.msra.mxu0 %v413
        %438 = vmatprep.subr.bf16.mxu0 0
        %439 = vmatpush1.bf16.msra.mxu0 %v412
        %440 = vmatprep.subr.bf16.mxu0 0
        %441 = vmatpush2.bf16.msra.mxu0 0
        %442 = vmatprep.subr.bf16.mxu0 0
        %443 = vmatpush2.bf16.msra.mxu0 0
        %444 = vmatprep.subr.bf16.mxu0 0
        %445 = vmatpush2.bf16.msra.mxu0 0
        %446 = vmatprep.subr.bf16.mxu0 0
        %447 = vmatpush2.bf16.msra.mxu0 0
        %448 = vmatprep.subr.bf16.mxu0 0
        %449 = vmatpush2.bf16.msra.mxu0 0
        %450 = vmatprep.subr.bf16.mxu0 0
        %451 = vmatpush2.bf16.msra.mxu0 0
        %452 = vmatprep.subr.bf16.mxu0 0
        %453 = vmatpush2.bf16.msra.mxu0 0
        %454 = vmatprep.subr.bf16.mxu0 0
        %455 = vmatpush2.bf16.msra.mxu0 0
        %456 = vmatprep.mubr.bf16.mxu0 0
        %457 = vmatmul.mubr.bf16.gmra.mxu0 %v422
        %v458 = vpop.f32.mrf.mxu0
        %v459 = vadd.f32 0.0, %v458
        %v460 = vpop.f32.mrf.mxu0
        %v461 = vpop.f32.mrf.mxu0
        %v462 = vpop.f32.mrf.mxu0
        %463 = vdwg.mxu0
        %v464 = vadd.f32 %v386, %v459
        %465 = vst.msk [vmem:[#allocation2] sm:$0xff] %vm316, %v464
        // Predicated region
        $region45: #{tpu_custom_call.1} parent=39 // pred_check
          %p466 = pneg %p286
        $region46: #{tpu_custom_call.1} parent=39 // pred_check_branch
          %468 = sbr.rel (%p466) target = $region48
        $region47: #{tpu_custom_call.1} parent=39 // pred_region
          %v469 = vld [vmem:[#allocation2] sm:$0xff]
          %v470 = vld [vmem:[%s4] sm:$0x1]
          %v472 = vlaneseq
          %v473 = vshrl.u32 %v472, 7
          %v474 = vsub.s32 0, %v473
          %v475 = vrot.slane %v470, %v474
          %v477 = vadd.f32 %v469, %v475
          %478 = vst.msk [vmem:[%s267] sm:$0xff] %vm316, %v477
        $region48: #{tpu_custom_call.1} parent=39 // pred_fallthru
          _
        %s479 = sand.u32 %s164, 1
        %s480 = scalar_lea.sflag [#allocation4], %s479
        %s481 = sand.u32 %s164, 1
        %s482 = smul.addr %s481, 8
        %s483 = scalar_lea.vmem [#allocation3], %s482
        // Predicated region
        $region49: #{tpu_custom_call.1} parent=39 // pred_check
          %p484 = pneg %p174
        $region50: #{tpu_custom_call.1} parent=39 // pred_check_branch
          %486 = sbr.rel (%p484) target = $region52
        $region51: #{tpu_custom_call.1} parent=39 // pred_region
          %s488 = ssub.s32 128, 128
          %489 = vsyncadd %s480, %s488
          %s490 = smul.addr %s23, 128
          %s491 = scalar_lea.hbm %s5, %s490
          %s493 = sshll.u32 %s483, 4
          %s494 = int_to_ptr.vmem [resolvable:$true] %s493
          %496 = dma.vmem_to_hbm [thread:$0]  %s494, 128, %s491, %s480
        $region52: #{tpu_custom_call.1} parent=39 // pred_fallthru
          _
      $region40: #{tpu_custom_call.1} parent=5 // pred_fallthru
        _
      %p497 = scmp.le.s32.totalorder 2, %s14
      // Predicated region
      $region53: #{tpu_custom_call.1} parent=5 // pred_check
        %p498 = pneg %p497
      $region54: #{tpu_custom_call.1} parent=5 // pred_check_branch
        %500 = sbr.rel (%p498) target = $region56
      $region55: #{tpu_custom_call.1} parent=5 // pred_region
        %s501 = ssub.s32 %s14, 2
        // Predicated region
        $region57: #{tpu_custom_call.1} parent=55 // pred_check
          %p502 = pneg %p180
        $region58: #{tpu_custom_call.1} parent=55 // pred_check_branch
          %504 = sbr.rel (%p502) target = $region60
        $region59: #{tpu_custom_call.1} parent=55 // pred_region
          %s505 = sand.u32 %s165, 1
          %s506 = scalar_lea.sflag [#allocation4], %s505
          %s507 = sand.u32 %s165, 1
          %s508 = smul.addr %s507, 8
          %s509 = scalar_lea.vmem [#allocation3], %s508
          %510 = dma.done %s506, 128
        $region60: #{tpu_custom_call.1} parent=55 // pred_fallthru
          _
      $region56: #{tpu_custom_call.1} parent=5 // pred_fallthru
        _
    $region6: #{tpu_custom_call.1} parent=1 // loop_footer
      %s18 = sadd.s32 1, %s14
    $region7: #{tpu_custom_call.1} parent=1 // loop_footer_branch
      %13 = sbr.rel target = $region3
    $region8: #{tpu_custom_call.1} parent=1 // loop_exit
      _
    %511 = vsyncpa [#allocation4], 1
    %s512 = scalar_lea.sflag [#allocation4], 1
    %513 = vsyncpa %s512, 1

</llo_original>
